<compile_context>
chip_gen: v7x
topology: tpu7x:2x2x1
jax: 0.10.0
libtpu: 0.0.40
codegen_flags: <defaults>
</compile_context>

<pallas_src>
import functools

import jax
import jax.numpy as jnp
from jax import lax
from jax.experimental import pallas as pl
from jax.experimental.pallas import tpu as pltpu

_LANES = 128                      # lane width of the flattened layout
_CHUNK_ROWS = 512                 # 512*128*4 B = 256 KiB of f32 temps per chunk
_SCALAR_MAX_ROWS = 4096           # single-block scalar-output path up to ~2 MiB/input (f32)
_MAX_BLK_BYTES = 4 * 1024 * 1024  # ~4 MiB per input per block (VMEM-safe on v5e/v6e/v7x)


def _round_up(x, m):
    return ((x + m - 1) // m) * m


def _block_partial_sum(real_ref, fake_ref, *, blk_rows, chunk_rows, n,
                       apply_mask, blk_base_rows):
    """(8, 128) f32 partial sum of 1.2*(-log real) + (-log(1 - fake)) over one block."""
    nchunks = blk_rows // chunk_rows

    def chunk_term(row0):
        r = real_ref[pl.ds(row0, chunk_rows), :].astype(jnp.float32)
        f = fake_ref[pl.ds(row0, chunk_rows), :].astype(jnp.float32)
        # BCE(target=1) = -log(x); BCE(target=0) = -log(1-x); PyTorch clamps at -100.
        term = -(1.2 * jnp.maximum(jnp.log(r), -100.0)
                 + jnp.maximum(jnp.log(1.0 - f), -100.0))
        if apply_mask:
            row = lax.broadcasted_iota(jnp.int32, (chunk_rows, _LANES), 0)
            lane = lax.broadcasted_iota(jnp.int32, (chunk_rows, _LANES), 1)
            idx = (blk_base_rows + row0 + row) * _LANES + lane
            term = jnp.where(idx < n, term, 0.0)
        # Fold sublane groups of 8 with pure vreg adds -> (8, 128).
        return jnp.sum(term.reshape(chunk_rows // 8, 8, _LANES), axis=0)

    if nchunks == 1:
        return chunk_term(0)

    def body(c, acc):
        row0 = pl.multiple_of(c * chunk_rows, chunk_rows)
        return acc + chunk_term(row0)

    return lax.fori_loop(0, nchunks, body,
                         jnp.zeros((8, _LANES), jnp.float32), unroll=True)


def _d_loss_scalar_kernel(real_ref, fake_ref, out_ref, *, blk_rows, chunk_rows,
                          n, need_mask):
    acc = _block_partial_sum(real_ref, fake_ref, blk_rows=blk_rows,
                             chunk_rows=chunk_rows, n=n,
                             apply_mask=need_mask, blk_base_rows=0)
    # Finalize the scalar loss in-kernel (mean over the N valid elements).
    out_ref[...] = jnp.broadcast_to(jnp.sum(acc) * (1.0 / n), (1, 1))


def _d_loss_partials_kernel(real_ref, fake_ref, part_ref, *, blk_rows, chunk_rows,
                            n, num_blocks, need_mask):
    blk = pl.program_id(0)
    common = dict(blk_rows=blk_rows, chunk_rows=chunk_rows, n=n)

    if need_mask:
        last = num_blocks - 1

        @pl.when(blk != last)
        def _():
            part_ref[...] = _block_partial_sum(
                real_ref, fake_ref, apply_mask=False,
                blk_base_rows=blk * blk_rows, **common)

        @pl.when(blk == last)
        def _():
            part_ref[...] = _block_partial_sum(
                real_ref, fake_ref, apply_mask=True,
                blk_base_rows=blk * blk_rows, **common)
    else:
        part_ref[...] = _block_partial_sum(
            real_ref, fake_ref, apply_mask=False,
            blk_base_rows=blk * blk_rows, **common)


def d_loss(real_disc, fake_disc):
    assert real_disc.shape == fake_disc.shape
    orig_dtype = real_disc.dtype
    n = real_disc.size
    itemsize = jnp.dtype(orig_dtype).itemsize

    real_flat = real_disc.reshape(-1)
    fake_flat = fake_disc.reshape(-1)
    rows = pl.cdiv(n, _LANES)
    if rows * _LANES != n:
        # Only for non-128-aligned element counts: pad the flat view to whole
        # 128-lane rows.  Pad values are irrelevant - the kernel masks them.
        pad = rows * _LANES - n
        real_flat = jnp.pad(real_flat, (0, pad), constant_values=0.5)
        fake_flat = jnp.pad(fake_flat, (0, pad), constant_values=0.5)
    real2d = real_flat.reshape(rows, _LANES)
    fake2d = fake_flat.reshape(rows, _LANES)

    # Block sizing: native sublane packing for the dtype, 512-row chunk
    # granularity, ~4 MiB/input cap, and >=4 blocks for large inputs so the
    # "parallel" grid axis keeps both v7x TensorCores busy.
    pack = max(8, 32 // itemsize)
    max_blk_rows = max(_CHUNK_ROWS,
                       (_MAX_BLK_BYTES // (_LANES * itemsize)) // _CHUNK_ROWS * _CHUNK_ROWS)
    rows_p = _round_up(rows, pack)
    if rows_p <= _CHUNK_ROWS:
        blk_rows = rows_p                              # tiny: single chunk
    elif rows_p <= _SCALAR_MAX_ROWS:
        blk_rows = _round_up(rows_p, _CHUNK_ROWS)      # small: one block, chunked accum
    else:
        blk_rows = min(_round_up(pl.cdiv(rows_p, 4), _CHUNK_ROWS), max_blk_rows)
    chunk_rows = min(blk_rows, _CHUNK_ROWS)
    num_blocks = pl.cdiv(rows, blk_rows)
    # Mask needed iff the grid covers more elements than n (lane tail and/or a
    # partial last block whose out-of-bounds rows read unspecified data).
    need_mask = (num_blocks * blk_rows * _LANES) != n

    in_specs = [
        pl.BlockSpec((blk_rows, _LANES), lambda i: (i, 0)),
        pl.BlockSpec((blk_rows, _LANES), lambda i: (i, 0)),
    ]
    compiler_params = pltpu.CompilerParams(
        # Independent blocks -> megacore sharding on v7x (no-op on v5e/v6e).
        dimension_semantics=("parallel",),
        # Explicit limit: required on v5e (16 MiB scoped default); equals the
        # v6e/v7x default.  Peak use here is ~16 MiB of double-buffered block
        # inputs plus <2 MiB of chunk temps.
        vmem_limit_bytes=32 * 1024 * 1024,
    )
    cost = pl.CostEstimate(
        flops=12 * n,
        transcendentals=2 * n,
        bytes_accessed=2 * n * itemsize + num_blocks * 8 * _LANES * 4,
    )

    if num_blocks == 1:
        # Typical GAN-discriminator sizes: single grid step, scalar loss
        # finalized in-kernel (no wrapper-side sum/divide ops).
        kernel = functools.partial(
            _d_loss_scalar_kernel, blk_rows=blk_rows, chunk_rows=chunk_rows,
            n=n, need_mask=need_mask)
        out = pl.pallas_call(
            kernel,
            out_shape=jax.ShapeDtypeStruct((1, 1), jnp.float32),
            grid=(1,),
            in_specs=in_specs,
            out_specs=pl.BlockSpec((1, 1), lambda i: (0, 0)),
            compiler_params=compiler_params,
            cost_estimate=cost,
        )(real2d, fake2d)
        return out[0, 0].astype(orig_dtype)

    kernel = functools.partial(
        _d_loss_partials_kernel, blk_rows=blk_rows, chunk_rows=chunk_rows,
        n=n, num_blocks=num_blocks, need_mask=need_mask)
    partials = pl.pallas_call(
        kernel,
        out_shape=jax.ShapeDtypeStruct((num_blocks * 8, _LANES), jnp.float32),
        grid=(num_blocks,),
        in_specs=in_specs,
        out_specs=pl.BlockSpec((8, _LANES), lambda i: (i, 0)),
        compiler_params=compiler_params,
        cost_estimate=cost,
    )(real2d, fake2d)
    # Tiny finalize: num_blocks x (8,128) f32 partials -> scalar mean.
    return (jnp.sum(partials) / float(n)).astype(orig_dtype)


def _d_loss_ref(real_disc, fake_disc):
    r = real_disc.astype(jnp.float32)
    f = fake_disc.astype(jnp.float32)
    true_loss = jnp.mean(-jnp.maximum(jnp.log(r), -100.0))
    fake_loss = jnp.mean(-jnp.maximum(jnp.log(1.0 - f), -100.0))
    return (true_loss * 1.2 + fake_loss).astype(real_disc.dtype)


if __name__ == "__main__":
    key = jax.random.PRNGKey(0)
    k1, k2 = jax.random.split(key)
    B, C, H, W = 2, 4, 16, 16
    # Discriminator outputs must be probabilities in (0, 1) for BCELoss.
    real_disc = jax.nn.sigmoid(jax.random.normal(k1, (B, C, H, W), jnp.float32))
    fake_disc = jax.nn.sigmoid(jax.random.normal(k2, (B, C, H, W), jnp.float32))

    loss = jax.block_until_ready(d_loss(real_disc, fake_disc))
    ref = jax.block_until_ready(_d_loss_ref(real_disc, fake_disc))

    assert jnp.allclose(loss, ref, rtol=1e-5, atol=1e-5), (loss, ref)
    print("KERNEL_OK")
</pallas_src>

<mosaic_0001>
module attributes {stable_mosaic.version = 11 : i64} {
  func.func @_d_loss_scalar_kernel(%arg0: i32, %arg1: memref<16x128xf32, #tpu.memory_space<vmem>>, %arg2: memref<16x128xf32, #tpu.memory_space<vmem>>, %arg3: memref<1x1xf32, #tpu.memory_space<vmem>>) attributes {dimension_semantics = [#tpu.dimension_semantics<parallel>], iteration_bounds = array<i64: 1>, scalar_prefetch = 0 : i64, scratch_operands = 0 : i64, tpu.core_type = #tpu.core_type<tc>, window_params = [{transform_indices = @transform_0, window_bounds = array<i64: 16, 128>}, {transform_indices = @transform_1, window_bounds = array<i64: 16, 128>}, {pipeline_mode = #tpu.pipeline_mode<synchronous>, transform_indices = @transform_2, window_bounds = array<i64: 1, 1>}]} {
    %c0 = arith.constant 0 : index
    %c0_0 = arith.constant 0 : index
    %0 = vector.load %arg1[%c0, %c0_0] : memref<16x128xf32, #tpu.memory_space<vmem>>, vector<16x128xf32>
    %c0_1 = arith.constant 0 : index
    %c0_2 = arith.constant 0 : index
    %1 = vector.load %arg2[%c0_1, %c0_2] : memref<16x128xf32, #tpu.memory_space<vmem>>, vector<16x128xf32>
    %2 = math.log %0 : vector<16x128xf32>
    %cst = arith.constant -1.000000e+02 : f32
    %3 = vector.broadcast %cst : f32 to vector<16x128xf32>
    %4 = arith.maximumf %2, %3 : vector<16x128xf32>
    %cst_3 = arith.constant 1.200000e+00 : f32
    %5 = vector.broadcast %cst_3 : f32 to vector<16x128xf32>
    %6 = arith.mulf %5, %4 : vector<16x128xf32>
    %cst_4 = arith.constant 1.000000e+00 : f32
    %7 = vector.broadcast %cst_4 : f32 to vector<16x128xf32>
    %8 = arith.subf %7, %1 : vector<16x128xf32>
    %9 = math.log %8 : vector<16x128xf32>
    %cst_5 = arith.constant -1.000000e+02 : f32
    %10 = vector.broadcast %cst_5 : f32 to vector<16x128xf32>
    %11 = arith.maximumf %9, %10 : vector<16x128xf32>
    %12 = arith.addf %6, %11 : vector<16x128xf32>
    %cst_6 = arith.constant 0.000000e+00 : f32
    %13 = vector.broadcast %cst_6 : f32 to vector<16x128xf32>
    %14 = arith.subf %13, %12 : vector<16x128xf32>
    %15 = vector.shape_cast %14 : vector<16x128xf32> to vector<2x8x128xf32>
    %cst_7 = arith.constant dense<0.000000e+00> : vector<8x128xf32>
    %16 = vector.multi_reduction <add>, %15, %cst_7 [0] : vector<2x8x128xf32> to vector<8x128xf32>
    %17 = vector.shape_cast %16 : vector<8x128xf32> to vector<1x8x128xf32>
    %cst_8 = arith.constant dense<0.000000e+00> : vector<1xf32>
    %18 = vector.multi_reduction <add>, %17, %cst_8 [1, 2] : vector<1x8x128xf32> to vector<1xf32>
    %19 = vector.shape_cast %18 : vector<1xf32> to vector<1x1x1xf32>
    %20 = vector.extract %19[0, 0, 0] : f32 from vector<1x1x1xf32>
    %cst_9 = arith.constant 4.8828125E-4 : f32
    %21 = arith.mulf %20, %cst_9 : f32
    %22 = vector.broadcast %21 : f32 to vector<1x1xf32>
    %c0_10 = arith.constant 0 : index
    %c0_11 = arith.constant 0 : index
    %23 = vector.load %arg3[%c0_10, %c0_11] : memref<1x1xf32, #tpu.memory_space<vmem>>, vector<1x1xf32>
    tpu.vector_store %arg3[%c0_10, %c0_11], %22 {strides = array<i32>} : memref<1x1xf32, #tpu.memory_space<vmem>>, vector<1x1xf32>,
    return
  }
  func.func @transform_0(%arg0: i32) -> (i32, i32) {
    %c0_i32 = arith.constant 0 : i32
    %c0_i32_0 = arith.constant 0 : i32
    return %arg0, %c0_i32 : i32, i32
  }
  func.func @transform_1(%arg0: i32) -> (i32, i32) {
    %c0_i32 = arith.constant 0 : i32
    %c0_i32_0 = arith.constant 0 : i32
    return %arg0, %c0_i32 : i32, i32
  }
  func.func @transform_2(%arg0: i32) -> (i32, i32) {
    %c0_i32 = arith.constant 0 : i32
    %c0_i32_0 = arith.constant 0 : i32
    %c0_i32_1 = arith.constant 0 : i32
    return %c0_i32, %c0_i32_0 : i32, i32
  }
}

</mosaic_0001>

<llo_original>
// kernel: tpu_custom_call.1
$region0: #{tpu_custom_call.1}
  #allocation0 [shape = 'u32[]', space=smem, size = 0x4, offset = 0x4, fixed_abs, tag = 'smem constant byte address 0x4 - core index']
  #allocation1 [shape = 'u32[144,128]{1,0:T(1,128)}', space=vmem, size = 0x12000, scoped, tag = 'internal scratch']
  %s0 = inlined_call_operand.hbm [shape: f32[16,128], index: 0, kind: input, shape index: {}]
  %s1 = inlined_call_operand.hbm [shape: f32[16,128], index: 1, kind: input, shape index: {}]
  %s2 = inlined_call_operand.hbm [shape: f32[1,1], index: 2, kind: output, shape index: {}]
  %s3 = sld [smem:[#allocation0]]
  $region26: #{tpu_custom_call.1} parent=0
    _
  %s5 = ssub.s32 1, %s3
  %s6 = scalar_select 0, %s5, %s3
  $region1: #{tpu_custom_call.1} parent=0
    #allocation2 [shape = 'u8[8192]{0}', space=vmem, size = 0x2000, scoped, tag = 'input window, operand 0, single buffered']
    #allocation3 [shape = 's32[1]{0}', space=sflag, size = 0x4, scoped, tag = 'scoped memory for tpu_custom_call.1']
    #allocation4 [shape = 's32[1]{0}', space=sflag, size = 0x4, scoped, tag = 'scoped memory for tpu_custom_call.1']
    #allocation5 [shape = 'u8[8192]{0}', space=vmem, size = 0x2000, scoped, tag = 'input window, operand 1, single buffered']
    #allocation6 [shape = 's32[1]{0}', space=sflag, size = 0x4, scoped, tag = 'scoped memory for tpu_custom_call.1']
    #allocation7 [shape = 'u8[512]{0}', space=vmem, size = 0x400, scoped, tag = 'output window, operand 0, single buffered']
    %7 = vsyncpa [#allocation3], 0
    %8 = vsyncpa [#allocation6], 0
    %9 = vsyncpa [#allocation4], 0
    // Predicated region
    $region2: #{tpu_custom_call.1} parent=1 // pred_check
      _
    $region3: #{tpu_custom_call.1} parent=1 // pred_check_branch
      %11 = sbr.rel (0) target = $region5
    $region4: #{tpu_custom_call.1} parent=1 // pred_region
      %s13 = ssub.s32 256, 256
      %14 = vsyncadd [#allocation3], %s13
      %s15 = sshll.u32 [#allocation2], 4
      %s16 = int_to_ptr.vmem [resolvable:$true] %s15
      %21 = dma.hbm_to_vmem [thread:$0]  %s0, 256, %s16, [#allocation3], 128, 128, 8
    $region5: #{tpu_custom_call.1} parent=1 // pred_fallthru
      _
    // Predicated region
    $region6: #{tpu_custom_call.1} parent=1 // pred_check
      _
    $region7: #{tpu_custom_call.1} parent=1 // pred_check_branch
      %23 = sbr.rel (0) target = $region9
    $region8: #{tpu_custom_call.1} parent=1 // pred_region
      %s25 = ssub.s32 256, 256
      %26 = vsyncadd [#allocation6], %s25
      %s27 = sshll.u32 [#allocation5], 4
      %s28 = int_to_ptr.vmem [resolvable:$true] %s27
      %33 = dma.hbm_to_vmem [thread:$0]  %s1, 256, %s28, [#allocation6], 128, 128, 8
    $region9: #{tpu_custom_call.1} parent=1 // pred_fallthru
      _
    // Predicated region
    $region10: #{tpu_custom_call.1} parent=1 // pred_check
      _
    $region11: #{tpu_custom_call.1} parent=1 // pred_check_branch
      %35 = sbr.rel (0) target = $region13
    $region12: #{tpu_custom_call.1} parent=1 // pred_region
      %36 = dma.done [#allocation3], 256
    $region13: #{tpu_custom_call.1} parent=1 // pred_fallthru
      _
    // Predicated region
    $region14: #{tpu_custom_call.1} parent=1 // pred_check
      _
    $region15: #{tpu_custom_call.1} parent=1 // pred_check_branch
      %38 = sbr.rel (0) target = $region17
    $region16: #{tpu_custom_call.1} parent=1 // pred_region
      %39 = dma.done [#allocation6], 256
    $region17: #{tpu_custom_call.1} parent=1 // pred_fallthru
      _
    %v40 = vld [vmem:[#allocation2] sm:$0xff]
    %v41 = vld [vmem:[#allocation2 + $0x8] sm:$0xff]
    %v42 = vld [vmem:[#allocation5] sm:$0xff]
    %v43 = vld [vmem:[#allocation5 + $0x8] sm:$0xff]
    %v44 = vlog2.pop %v40
    %v45 = vmul.f32 %v44, 0.6931472
    %v46 = vlog2.pop %v41
    %v47 = vmul.f32 %v46, 0.6931472
    %v48 = vmax.f32 %v45, -100.0
    %v49 = vmax.f32 %v47, -100.0
    %v50 = vmul.f32 %v48, 1.2
    %v51 = vmul.f32 %v49, 1.2
    %v52 = vsub.f32 1.0, %v42
    %v53 = vsub.f32 1.0, %v43
    %v54 = vlog2.pop %v52
    %v55 = vmul.f32 %v54, 0.6931472
    %v56 = vlog2.pop %v53
    %v57 = vmul.f32 %v56, 0.6931472
    %v58 = vmax.f32 %v55, -100.0
    %v59 = vmax.f32 %v57, -100.0
    %v60 = vadd.f32 %v50, %v58
    %v61 = vadd.f32 %v51, %v59
    %v62 = vsub.f32 0.0, %v60
    %v63 = vsub.f32 0.0, %v61
    %v64 = vadd.f32 %v62, %v63
    %65 = vadd.xlane.f32.xlu0 %v64
    %v66 = vpop.xlane.xlu0 %65
    %v67 = vrot.slane %v66, 4
    %v68 = vadd.f32 %v66, %v67
    %v69 = vrot.slane %v68, 2
    %v70 = vadd.f32 %v68, %v69
    %v71 = vrot.slane %v70, 1
    %v72 = vadd.f32 %v70, %v71
    %s73 = vtos %v72
    %s74 = smul.f32 %s73, 0.00048828125
    %v75 = vstv %s74
    %vm76 = vcmask 0
    %77 = vst.msk [vmem:[#allocation7] sm:$0x1] %vm76, %v75
    // Predicated region
    $region18: #{tpu_custom_call.1} parent=1 // pred_check
      _
    $region19: #{tpu_custom_call.1} parent=1 // pred_check_branch
      %79 = sbr.rel (0) target = $region21
    $region20: #{tpu_custom_call.1} parent=1 // pred_region
      %s81 = ssub.s32 16, 16
      %82 = vsyncadd [#allocation4], %s81
      %s84 = sshll.u32 [#allocation7], 4
      %s85 = int_to_ptr.vmem [resolvable:$true] %s84
      %87 = dma.vmem_to_hbm [thread:$0]  %s85, 16, %s2, [#allocation4]
    $region21: #{tpu_custom_call.1} parent=1 // pred_fallthru
      _
    // Predicated region
    $region22: #{tpu_custom_call.1} parent=1 // pred_check
      _
    $region23: #{tpu_custom_call.1} parent=1 // pred_check_branch
      %89 = sbr.rel (0) target = $region25
    $region24: #{tpu_custom_call.1} parent=1 // pred_region
      %90 = dma.done [#allocation4], 16
    $region25: #{tpu_custom_call.1} parent=1 // pred_fallthru
      _
    %91 = vsyncpa [#allocation3], 1
    %92 = vsyncpa [#allocation6], 1
    %93 = vsyncpa [#allocation4], 1

</llo_original>
